<compile_context>
chip_gen: v7x
topology: tpu7x:2x2x1
jax: 0.10.0
libtpu: 0.0.40
codegen_flags: <defaults>
</compile_context>

<pallas_src>
import functools

import jax
import jax.numpy as jnp
from jax.experimental import pallas as pl
from jax.experimental.pallas import tpu as pltpu


def _round_up(x, m):
    return ((x + m - 1) // m) * m


def _image_freq_sel_kernel(tr_ref, ti_ref, pr_ref, pi_ref, img_ref, out_ref,
                           *, inv_s):
    """Fused Text2ImageGate + image gating.

    tr/ti : (1, S, D)     real / imag of the text frequencies (one batch)
    pr/pi : (S, D)        real / imag of select_para
    img   : (1, 2, TN, D) [real, imag] planes of one image-row tile
    out   : (1, 2, TN, D)
    """
    tr = tr_ref[0]
    ti = ti_ref[0]
    # real part of text * view_as_complex(select_para), averaged over the
    # sequence axis.  Zero padding along S contributes nothing to the sum;
    # inv_s is 1 / true_sequence_length.
    gate = jnp.sum(tr * pr_ref[...] - ti * pi_ref[...],
                   axis=0, keepdims=True) * inv_s          # (1, D)
    out_ref[0, 0] = img_ref[0, 0] * gate                   # real plane
    out_ref[0, 1] = img_ref[0, 1] * gate                   # imag plane


def image_frequency_selection(image, text, select_para, *, tile_n=256):
    """Pallas forward of ImageFrequencySelection.

    image       : (B, N, D) complex (or real) image frequency features
    text        : (B, S, D) complex text frequency features
    select_para : (S, D, 2) float32  (real/imag pair, as the torch Parameter)
    returns       (B, N, D), complex iff `image` is complex
    """
    B, N, D = image.shape
    S = text.shape[1]

    tr = jnp.real(text).astype(jnp.float32)
    ti = jnp.imag(text).astype(jnp.float32)
    pr = select_para[..., 0].astype(jnp.float32)
    pi = select_para[..., 1].astype(jnp.float32)
    img_ri = jnp.stack([jnp.real(image).astype(jnp.float32),
                        jnp.imag(image).astype(jnp.float32)], axis=1)  # (B,2,N,D)

    # TPU-friendly padding: lane dim -> multiple of 128, sublane dims -> 8.
    D_pad = _round_up(D, 128)
    S_pad = _round_up(S, 8)
    TN = min(_round_up(N, 8), tile_n)          # row tile (multiple of 8)
    N_pad = _round_up(N, TN)

    tr = jnp.pad(tr, ((0, 0), (0, S_pad - S), (0, D_pad - D)))
    ti = jnp.pad(ti, ((0, 0), (0, S_pad - S), (0, D_pad - D)))
    pr = jnp.pad(pr, ((0, S_pad - S), (0, D_pad - D)))
    pi = jnp.pad(pi, ((0, S_pad - S), (0, D_pad - D)))
    img_ri = jnp.pad(img_ri, ((0, 0), (0, 0), (0, N_pad - N), (0, D_pad - D)))

    grid = (B, N_pad // TN)
    out = pl.pallas_call(
        functools.partial(_image_freq_sel_kernel, inv_s=1.0 / S),
        grid=grid,
        in_specs=[
            pl.BlockSpec((1, S_pad, D_pad), lambda b, nb: (b, 0, 0)),
            pl.BlockSpec((1, S_pad, D_pad), lambda b, nb: (b, 0, 0)),
            pl.BlockSpec((S_pad, D_pad), lambda b, nb: (0, 0)),
            pl.BlockSpec((S_pad, D_pad), lambda b, nb: (0, 0)),
            pl.BlockSpec((1, 2, TN, D_pad), lambda b, nb: (b, 0, nb, 0)),
        ],
        out_specs=pl.BlockSpec((1, 2, TN, D_pad), lambda b, nb: (b, 0, nb, 0)),
        out_shape=jax.ShapeDtypeStruct((B, 2, N_pad, D_pad), jnp.float32),
        compiler_params=pltpu.CompilerParams(
            dimension_semantics=("parallel", "parallel")),
    )(tr, ti, pr, pi, img_ri)

    out = out[:, :, :N, :D]
    if jnp.iscomplexobj(image):
        return (out[:, 0] + 1j * out[:, 1]).astype(image.dtype)
    return out[:, 0].astype(image.dtype)


if __name__ == "__main__":
    key = jax.random.PRNGKey(0)
    k1, k2, k3, k4, k5 = jax.random.split(key, 5)
    # batch=2, text freq length s=8, image freq length n=16, d_model=32
    B, S, N, D = 2, 8, 16, 32

    text = (jax.random.normal(k1, (B, S, D), jnp.float32)
            + 1j * jax.random.normal(k2, (B, S, D), jnp.float32))
    image = (jax.random.normal(k3, (B, N, D), jnp.float32)
             + 1j * jax.random.normal(k4, (B, N, D), jnp.float32))
    select_para = jax.random.normal(k5, (S, D, 2), jnp.float32)

    fwd = jax.jit(image_frequency_selection)
    out = jax.block_until_ready(fwd(image, text, select_para))

    # Pure-JAX reference mirroring the PyTorch module exactly:
    #   gate = avg_pool_s(real(text * view_as_complex(select_para)))
    #   out  = image * gate
    gate = jnp.mean(
        jnp.real(text * (select_para[..., 0] + 1j * select_para[..., 1])),
        axis=1, keepdims=True)
    ref = image * gate

    assert out.shape == (B, N, D)
    assert out.dtype == image.dtype
    assert jnp.allclose(out, ref, rtol=1e-4, atol=1e-4), \
        float(jnp.max(jnp.abs(out - ref)))
    print("KERNEL_OK")
</pallas_src>

<mosaic_0001>
module attributes {stable_mosaic.version = 11 : i64} {
  func.func @_image_freq_sel_kernel(%arg0: i32, %arg1: i32, %arg2: memref<1x8x128xf32, #tpu.memory_space<vmem>>, %arg3: memref<1x8x128xf32, #tpu.memory_space<vmem>>, %arg4: memref<8x128xf32, #tpu.memory_space<vmem>>, %arg5: memref<8x128xf32, #tpu.memory_space<vmem>>, %arg6: memref<1x2x16x128xf32, #tpu.memory_space<vmem>>, %arg7: memref<1x2x16x128xf32, #tpu.memory_space<vmem>>) attributes {dimension_semantics = [#tpu.dimension_semantics<parallel>, #tpu.dimension_semantics<parallel>], iteration_bounds = array<i64: 2, 1>, scalar_prefetch = 0 : i64, scratch_operands = 0 : i64, tpu.core_type = #tpu.core_type<tc>, window_params = [{transform_indices = @transform_0, window_bounds = array<i64: 1, 8, 128>}, {transform_indices = @transform_1, window_bounds = array<i64: 1, 8, 128>}, {pipeline_mode = #tpu.pipeline_mode<synchronous>, transform_indices = @transform_2, window_bounds = array<i64: 8, 128>}, {pipeline_mode = #tpu.pipeline_mode<synchronous>, transform_indices = @transform_3, window_bounds = array<i64: 8, 128>}, {transform_indices = @transform_4, window_bounds = array<i64: 1, 2, 16, 128>}, {transform_indices = @transform_5, window_bounds = array<i64: 1, 2, 16, 128>}]} {
    %c0 = arith.constant 0 : index
    %c0_0 = arith.constant 0 : index
    %c0_1 = arith.constant 0 : index
    %0 = vector.load %arg2[%c0, %c0_0, %c0_1] : memref<1x8x128xf32, #tpu.memory_space<vmem>>, vector<1x8x128xf32>
    %1 = vector.shape_cast %0 : vector<1x8x128xf32> to vector<8x128xf32>
    %c0_2 = arith.constant 0 : index
    %c0_3 = arith.constant 0 : index
    %c0_4 = arith.constant 0 : index
    %2 = vector.load %arg3[%c0_2, %c0_3, %c0_4] : memref<1x8x128xf32, #tpu.memory_space<vmem>>, vector<1x8x128xf32>
    %3 = vector.shape_cast %2 : vector<1x8x128xf32> to vector<8x128xf32>
    %c0_5 = arith.constant 0 : index
    %c0_6 = arith.constant 0 : index
    %4 = vector.load %arg4[%c0_5, %c0_6] : memref<8x128xf32, #tpu.memory_space<vmem>>, vector<8x128xf32>
    %5 = arith.mulf %1, %4 : vector<8x128xf32>
    %c0_7 = arith.constant 0 : index
    %c0_8 = arith.constant 0 : index
    %6 = vector.load %arg5[%c0_7, %c0_8] : memref<8x128xf32, #tpu.memory_space<vmem>>, vector<8x128xf32>
    %7 = arith.mulf %3, %6 : vector<8x128xf32>
    %8 = arith.subf %5, %7 : vector<8x128xf32>
    %cst = arith.constant dense<0.000000e+00> : vector<128xf32>
    %9 = vector.multi_reduction <add>, %8, %cst [0] : vector<8x128xf32> to vector<128xf32>
    %10 = vector.shape_cast %9 : vector<128xf32> to vector<1x128xf32>
    %cst_9 = arith.constant 1.250000e-01 : f32
    %11 = vector.broadcast %cst_9 : f32 to vector<1x128xf32>
    %12 = arith.mulf %10, %11 : vector<1x128xf32>
    %c0_10 = arith.constant 0 : index
    %c0_11 = arith.constant 0 : index
    %c0_12 = arith.constant 0 : index
    %c0_13 = arith.constant 0 : index
    %13 = vector.load %arg6[%c0_10, %c0_11, %c0_12, %c0_13] : memref<1x2x16x128xf32, #tpu.memory_space<vmem>>, vector<1x1x16x128xf32>
    %14 = vector.shape_cast %13 : vector<1x1x16x128xf32> to vector<16x128xf32>
    %15 = vector.broadcast %12 : vector<1x128xf32> to vector<16x128xf32>
    %16 = arith.mulf %14, %15 : vector<16x128xf32>
    %c0_14 = arith.constant 0 : index
    %c0_15 = arith.constant 0 : index
    %c0_16 = arith.constant 0 : index
    %c0_17 = arith.constant 0 : index
    %17 = vector.load %arg7[%c0_14, %c0_15, %c0_16, %c0_17] : memref<1x2x16x128xf32, #tpu.memory_space<vmem>>, vector<1x1x16x128xf32>
    %18 = vector.shape_cast %17 : vector<1x1x16x128xf32> to vector<16x128xf32>
    %19 = vector.shape_cast %16 : vector<16x128xf32> to vector<1x1x16x128xf32>
    tpu.vector_store %arg7[%c0_14, %c0_15, %c0_16, %c0_17], %19 {strides = array<i32>} : memref<1x2x16x128xf32, #tpu.memory_space<vmem>>, vector<1x1x16x128xf32>,
    %c0_18 = arith.constant 0 : index
    %c1 = arith.constant 1 : index
    %c0_19 = arith.constant 0 : index
    %c0_20 = arith.constant 0 : index
    %20 = vector.load %arg6[%c0_18, %c1, %c0_19, %c0_20] : memref<1x2x16x128xf32, #tpu.memory_space<vmem>>, vector<1x1x16x128xf32>
    %21 = vector.shape_cast %20 : vector<1x1x16x128xf32> to vector<16x128xf32>
    %22 = vector.broadcast %12 : vector<1x128xf32> to vector<16x128xf32>
    %23 = arith.mulf %21, %22 : vector<16x128xf32>
    %c0_21 = arith.constant 0 : index
    %c1_22 = arith.constant 1 : index
    %c0_23 = arith.constant 0 : index
    %c0_24 = arith.constant 0 : index
    %24 = vector.load %arg7[%c0_21, %c1_22, %c0_23, %c0_24] : memref<1x2x16x128xf32, #tpu.memory_space<vmem>>, vector<1x1x16x128xf32>
    %25 = vector.shape_cast %24 : vector<1x1x16x128xf32> to vector<16x128xf32>
    %26 = vector.shape_cast %23 : vector<16x128xf32> to vector<1x1x16x128xf32>
    tpu.vector_store %arg7[%c0_21, %c1_22, %c0_23, %c0_24], %26 {strides = array<i32>} : memref<1x2x16x128xf32, #tpu.memory_space<vmem>>, vector<1x1x16x128xf32>,
    return
  }
  func.func @transform_0(%arg0: i32, %arg1: i32) -> (i32, i32, i32) {
    %c0_i32 = arith.constant 0 : i32
    %c0_i32_0 = arith.constant 0 : i32
    %c0_i32_1 = arith.constant 0 : i32
    return %arg0, %c0_i32, %c0_i32_0 : i32, i32, i32
  }
  func.func @transform_1(%arg0: i32, %arg1: i32) -> (i32, i32, i32) {
    %c0_i32 = arith.constant 0 : i32
    %c0_i32_0 = arith.constant 0 : i32
    %c0_i32_1 = arith.constant 0 : i32
    return %arg0, %c0_i32, %c0_i32_0 : i32, i32, i32
  }
  func.func @transform_2(%arg0: i32, %arg1: i32) -> (i32, i32) {
    %c0_i32 = arith.constant 0 : i32
    %c0_i32_0 = arith.constant 0 : i32
    %c0_i32_1 = arith.constant 0 : i32
    return %c0_i32, %c0_i32_0 : i32, i32
  }
  func.func @transform_3(%arg0: i32, %arg1: i32) -> (i32, i32) {
    %c0_i32 = arith.constant 0 : i32
    %c0_i32_0 = arith.constant 0 : i32
    %c0_i32_1 = arith.constant 0 : i32
    return %c0_i32, %c0_i32_0 : i32, i32
  }
  func.func @transform_4(%arg0: i32, %arg1: i32) -> (i32, i32, i32, i32) {
    %c0_i32 = arith.constant 0 : i32
    %c0_i32_0 = arith.constant 0 : i32
    %c0_i32_1 = arith.constant 0 : i32
    return %arg0, %c0_i32, %arg1, %c0_i32_0 : i32, i32, i32, i32
  }
  func.func @transform_5(%arg0: i32, %arg1: i32) -> (i32, i32, i32, i32) {
    %c0_i32 = arith.constant 0 : i32
    %c0_i32_0 = arith.constant 0 : i32
    %c0_i32_1 = arith.constant 0 : i32
    return %arg0, %c0_i32, %arg1, %c0_i32_0 : i32, i32, i32, i32
  }
}

</mosaic_0001>

<llo_original>
// kernel: custom-call
$region0: #{custom-call}
  %s0 = inlined_call_operand.hbm [shape: c64[2,8,32], index: 0, kind: input, shape index: {}]
  %s1 = inlined_call_operand.vmem [shape: f32[2,8,32], index: 1, kind: output, shape index: {}]
  $region1: #{custom-call} parent=0
    #allocation0 [shape = 's32[1]{0}', space=sflag, size = 0x4, scoped, tag = 'scoped memory for custom-call']
    %2 = vsyncpa [#allocation0], 0
    %s3 = sshll.u32 %s1, 4
    %s4 = int_to_ptr.vmem [resolvable:$true] %s3
    %6 = dma.hbm_to_vmem [thread:$0]  %s0, 256, %s4, [#allocation0]
    %7 = dma.done [#allocation0], 256
    %8 = vsyncpa [#allocation0], 1

// kernel: custom-call.1
$region0: #{custom-call.1}
  %s0 = inlined_call_operand.hbm [shape: c64[2,8,32], index: 0, kind: input, shape index: {}]
  %s1 = inlined_call_operand.vmem [shape: f32[2,8,32], index: 1, kind: output, shape index: {}]
  %s2 = scalar_lea.hbm %s0, 256
  $region1: #{custom-call.1} parent=0
    #allocation0 [shape = 's32[1]{0}', space=sflag, size = 0x4, scoped, tag = 'scoped memory for custom-call.1']
    %3 = vsyncpa [#allocation0], 0
    %s4 = sshll.u32 %s1, 4
    %s5 = int_to_ptr.vmem [resolvable:$true] %s4
    %7 = dma.hbm_to_vmem [thread:$0]  %s2, 256, %s5, [#allocation0]
    %8 = dma.done [#allocation0], 256
    %9 = vsyncpa [#allocation0], 1

// kernel: custom-call.3
$region0: #{custom-call.3}
  %s0 = inlined_call_operand.hbm [shape: c64[2,16,32], index: 0, kind: input, shape index: {}]
  %s1 = inlined_call_operand.vmem [shape: f32[2,16,32], index: 1, kind: output, shape index: {}]
  %s2 = scalar_lea.hbm %s0, 512
  $region1: #{custom-call.3} parent=0
    #allocation0 [shape = 's32[1]{0}', space=sflag, size = 0x4, scoped, tag = 'scoped memory for custom-call.3']
    %3 = vsyncpa [#allocation0], 0
    %s4 = sshll.u32 %s1, 4
    %s5 = int_to_ptr.vmem [resolvable:$true] %s4
    %7 = dma.hbm_to_vmem [thread:$0]  %s2, 512, %s5, [#allocation0]
    %8 = dma.done [#allocation0], 512
    %9 = vsyncpa [#allocation0], 1

// kernel: custom-call.2
$region0: #{custom-call.2}
  %s0 = inlined_call_operand.hbm [shape: c64[2,16,32], index: 0, kind: input, shape index: {}]
  %s1 = inlined_call_operand.vmem [shape: f32[2,16,32], index: 1, kind: output, shape index: {}]
  $region1: #{custom-call.2} parent=0
    #allocation0 [shape = 's32[1]{0}', space=sflag, size = 0x4, scoped, tag = 'scoped memory for custom-call.2']
    %2 = vsyncpa [#allocation0], 0
    %s3 = sshll.u32 %s1, 4
    %s4 = int_to_ptr.vmem [resolvable:$true] %s3
    %6 = dma.hbm_to_vmem [thread:$0]  %s0, 512, %s4, [#allocation0]
    %7 = dma.done [#allocation0], 512
    %8 = vsyncpa [#allocation0], 1

// kernel: custom-call.4
$region0: #{custom-call.4}
  %s0 = inlined_call_operand.vmem [shape: f32[2,16,32], index: 0, kind: input, shape index: {}]
  %s1 = inlined_call_operand.vmem [shape: f32[2,16,32], index: 1, kind: input, shape index: {}]
  %s2 = inlined_call_operand.hbm [shape: c64[2,16,32], index: 2, kind: output, shape index: {}]
  %s3 = scalar_lea.hbm %s2, 512
  $region1: #{custom-call.4} parent=0
    #allocation0 [shape = 's32[1]{0}', space=sflag, size = 0x4, scoped, tag = 'scoped memory for custom-call.4']
    %4 = vsyncpa [#allocation0], 0
    %s5 = sshll.u32 %s0, 4
    %s6 = int_to_ptr.vmem [resolvable:$true] %s5
    %8 = dma.vmem_to_hbm [thread:$0]  %s6, 512, %s2, [#allocation0]
    %9 = dma.done [#allocation0], 512
    %10 = vsyncpa [#allocation0], 1
  $region2: #{custom-call.4} parent=0
    #allocation1 [shape = 's32[1]{0}', space=sflag, size = 0x4, scoped, tag = 'scoped memory for custom-call.4']
    %11 = vsyncpa [#allocation1], 0
    %s12 = sshll.u32 %s1, 4
    %s13 = int_to_ptr.vmem [resolvable:$true] %s12
    %15 = dma.vmem_to_hbm [thread:$0]  %s13, 512, %s3, [#allocation1]
    %16 = dma.done [#allocation1], 512
    %17 = vsyncpa [#allocation1], 1

// kernel: image_frequency_selection.1
$region0: #{image_frequency_selection.1}
  #allocation0 [shape = 'u32[]', space=smem, size = 0x4, offset = 0x4, fixed_abs, tag = 'smem constant byte address 0x4 - core index']
  #allocation1 [shape = 'u32[144,128]{1,0:T(1,128)}', space=vmem, size = 0x12000, scoped, tag = 'internal scratch']
  %s0 = inlined_call_operand.vmem [shape: f32[2,8,128], index: 0, kind: input, shape index: {}]
  %s1 = inlined_call_operand.vmem [shape: f32[2,8,128], index: 1, kind: input, shape index: {}]
  %s2 = inlined_call_operand.vmem [shape: f32[8,128], index: 2, kind: input, shape index: {}]
  %s3 = inlined_call_operand.vmem [shape: f32[8,128], index: 3, kind: input, shape index: {}]
  %s4 = inlined_call_operand.vmem [shape: f32[2,2,16,128], index: 4, kind: input, shape index: {}]
  %s5 = inlined_call_operand.vmem [shape: f32[2,2,16,128], index: 5, kind: output, shape index: {}]
  %s6 = sld [smem:[#allocation0]]
  $region53: #{image_frequency_selection.1} parent=0
    _
  %s8 = ssub.s32 1, %s6
  %s9 = scalar_select 0, %s8, %s6
  loop: start=0, step=1, limit=4
  $region2: #{image_frequency_selection.1} parent=0 // loop_pre_header
    _
  $region3: #{image_frequency_selection.1} parent=0 // loop_header
    %s11 = sphi 0, %s15
    %p12 = scmp.ge.s32.totalorder %s11, 4
    %s18 = sphi 0, %s30
    %s19 = sphi 0, %s26
    %s20 = sphi 0, %s18
    %s21 = sphi 0, %s19
    %s22 = sphi 0, %s20
    %s23 = sphi 0, %s21
    %s33 = sphi 0, %s35
    %s36 = sphi 0, %s33
    %s37 = sphi 0, %s36
    %s53 = sphi 0, %s37
    %s59 = sphi 0, %s61
    %s62 = sphi 0, %s59
    %s63 = sphi 0, %s62
    %s79 = sphi 0, %s63
    %s83 = sphi 0, %s83
    %s85 = sphi 0, %s83
    %s86 = sphi 0, %s85
    %s100 = sphi 0, %s86
    %s104 = sphi 0, %s104
    %s106 = sphi 0, %s104
    %s107 = sphi 0, %s106
    %s121 = sphi 0, %s107
    %s129 = sphi 0, %s131
    %s132 = sphi 0, %s129
    %s133 = sphi 0, %s132
    %s149 = sphi 0, %s133
    %s157 = sphi 0, %s159
    %s160 = sphi 0, %s157
    %s161 = sphi 0, %s160
    %s177 = sphi 0, %s161
  $region4: #{image_frequency_selection.1} parent=0 // loop_header_branch
    %14 = sbr.rel (%p12) target = $region8
  $region5: #{image_frequency_selection.1} parent=0 // loop_body
    %s16 = ssub.s32 %s11, 1
    %s17 = ssub.s32 %s11, 2
    %s24 = sadd.s32 1, %s19
    %p25 = scmp.ge.s32.totalorder %s24, 1
    %s26 = scalar_select %p25, 0, %s24
    %s27 = sadd.s32 1, %s18
    %s28 = scalar_select %p25, %s27, %s18
    %p29 = scmp.ge.s32.totalorder %s28, 2
    %s30 = scalar_select %p29, 0, %s28
    %s31 = ssub.s32 %s18, %s30
    %p32 = scmp.eq.s32.totalorder %s31, 0
    %s34 = sadd.s32 %s33, 1
    %s35 = scalar_select %p32, %s33, %s34
    %p38 = pneg %p32
    %p39 = scmp.eq.s32.totalorder %s11, 1
    %p40 = por %p38, %p39
    %p41 = scmp.ne.s32.totalorder %s33, %s36
    %p42 = scmp.eq.s32.totalorder %s11, 0
    %p43 = por %p41, %p42
    %p44 = scmp.ne.s32.totalorder %s33, %s36
    %p45 = scmp.eq.s32.totalorder %s16, 1
    %p46 = por %p44, %p45
    %p47 = scmp.ne.s32.totalorder %s36, %s37
    %p48 = scmp.eq.s32.totalorder %s16, 0
    %p49 = por %p47, %p48
    %p50 = scmp.ne.s32.totalorder %s36, %s37
    %p51 = scmp.eq.s32.totalorder %s17, 1
    %p52 = por %p50, %p51
    %p54 = scmp.ne.s32.totalorder %s37, %s53
    %p55 = scmp.eq.s32.totalorder %s17, 0
    %p56 = por %p54, %p55
    %s57 = ssub.s32 %s18, %s30
    %p58 = scmp.eq.s32.totalorder %s57, 0
    %s60 = sadd.s32 %s59, 1
    %s61 = scalar_select %p58, %s59, %s60
    %p64 = pneg %p58
    %p65 = scmp.eq.s32.totalorder %s11, 1
    %p66 = por %p64, %p65
    %p67 = scmp.ne.s32.totalorder %s59, %s62
    %p68 = scmp.eq.s32.totalorder %s11, 0
    %p69 = por %p67, %p68
    %p70 = scmp.ne.s32.totalorder %s59, %s62
    %p71 = scmp.eq.s32.totalorder %s16, 1
    %p72 = por %p70, %p71
    %p73 = scmp.ne.s32.totalorder %s62, %s63
    %p74 = scmp.eq.s32.totalorder %s16, 0
    %p75 = por %p73, %p74
    %p76 = scmp.ne.s32.totalorder %s62, %s63
    %p77 = scmp.eq.s32.totalorder %s17, 1
    %p78 = por %p76, %p77
    %p80 = scmp.ne.s32.totalorder %s63, %s79
    %p81 = scmp.eq.s32.totalorder %s17, 0
    %p82 = por %p80, %p81
    %s84 = sadd.s32 %s83, 1
    %p87 = scmp.eq.s32.totalorder %s11, 1
    %p88 = scmp.ne.s32.totalorder %s83, %s85
    %p89 = scmp.eq.s32.totalorder %s11, 0
    %p90 = por %p88, %p89
    %p91 = scmp.ne.s32.totalorder %s83, %s85
    %p92 = scmp.eq.s32.totalorder %s16, 1
    %p93 = por %p91, %p92
    %p94 = scmp.ne.s32.totalorder %s85, %s86
    %p95 = scmp.eq.s32.totalorder %s16, 0
    %p96 = por %p94, %p95
    %p97 = scmp.ne.s32.totalorder %s85, %s86
    %p98 = scmp.eq.s32.totalorder %s17, 1
    %p99 = por %p97, %p98
    %p101 = scmp.ne.s32.totalorder %s86, %s100
    %p102 = scmp.eq.s32.totalorder %s17, 0
    %p103 = por %p101, %p102
    %s105 = sadd.s32 %s104, 1
    %p108 = scmp.eq.s32.totalorder %s11, 1
    %p109 = scmp.ne.s32.totalorder %s104, %s106
    %p110 = scmp.eq.s32.totalorder %s11, 0
    %p111 = por %p109, %p110
    %p112 = scmp.ne.s32.totalorder %s104, %s106
    %p113 = scmp.eq.s32.totalorder %s16, 1
    %p114 = por %p112, %p113
    %p115 = scmp.ne.s32.totalorder %s106, %s107
    %p116 = scmp.eq.s32.totalorder %s16, 0
    %p117 = por %p115, %p116
    %p118 = scmp.ne.s32.totalorder %s106, %s107
    %p119 = scmp.eq.s32.totalorder %s17, 1
    %p120 = por %p118, %p119
    %p122 = scmp.ne.s32.totalorder %s107, %s121
    %p123 = scmp.eq.s32.totalorder %s17, 0
    %p124 = por %p122, %p123
    %s125 = ssub.s32 %s18, %s30
    %s126 = ssub.s32 %s19, %s26
    %s127 = sor.u32 %s125, %s126
    %p128 = scmp.eq.s32.totalorder %s127, 0
    %s130 = sadd.s32 %s129, 1
    %s131 = scalar_select %p128, %s129, %s130
    %p134 = pneg %p128
    %p135 = scmp.eq.s32.totalorder %s11, 1
    %p136 = por %p134, %p135
    %p137 = scmp.ne.s32.totalorder %s129, %s132
    %p138 = scmp.eq.s32.totalorder %s11, 0
    %p139 = por %p137, %p138
    %p140 = scmp.ne.s32.totalorder %s129, %s132
    %p141 = scmp.eq.s32.totalorder %s16, 1
    %p142 = por %p140, %p141
    %p143 = scmp.ne.s32.totalorder %s132, %s133
    %p144 = scmp.eq.s32.totalorder %s16, 0
    %p145 = por %p143, %p144
    %p146 = scmp.ne.s32.totalorder %s132, %s133
    %p147 = scmp.eq.s32.totalorder %s17, 1
    %p148 = por %p146, %p147
    %p150 = scmp.ne.s32.totalorder %s133, %s149
    %p151 = scmp.eq.s32.totalorder %s17, 0
    %p152 = por %p150, %p151
    %s153 = ssub.s32 %s18, %s30
    %s154 = ssub.s32 %s19, %s26
    %s155 = sor.u32 %s153, %s154
    %p156 = scmp.eq.s32.totalorder %s155, 0
    %s158 = sadd.s32 %s157, 1
    %s159 = scalar_select %p156, %s157, %s158
    %p162 = pneg %p156
    %p163 = scmp.eq.s32.totalorder %s11, 1
    %p164 = por %p162, %p163
    %p165 = scmp.ne.s32.totalorder %s157, %s160
    %p166 = scmp.eq.s32.totalorder %s11, 0
    %p167 = por %p165, %p166
    %p168 = scmp.ne.s32.totalorder %s157, %s160
    %p169 = scmp.eq.s32.totalorder %s16, 1
    %p170 = por %p168, %p169
    %p171 = scmp.ne.s32.totalorder %s160, %s161
    %p172 = scmp.eq.s32.totalorder %s16, 0
    %p173 = por %p171, %p172
    %p174 = scmp.ne.s32.totalorder %s160, %s161
    %p175 = scmp.eq.s32.totalorder %s17, 1
    %p176 = por %p174, %p175
    %p178 = scmp.ne.s32.totalorder %s161, %s177
    %p179 = scmp.eq.s32.totalorder %s17, 0
    %p180 = por %p178, %p179
    %p181 = scmp.le.s32.totalorder 1, %s11
    %p182 = scmp.lt.s32.totalorder %s11, 3
    %p183 = pnand %p181, %p182
    %p184 = pneg %p183
    // Predicated region
    $region9: #{image_frequency_selection.1} parent=5 // pred_check
      _
    $region10: #{image_frequency_selection.1} parent=5 // pred_check_branch
      %186 = sbr.rel (%p183) target = $region12
    $region11: #{image_frequency_selection.1} parent=5 // pred_region
      %s187 = ssub.s32 %s11, 1
      // Predicated region
      $region13: #{image_frequency_selection.1} parent=11 // pred_check
        %p188 = pneg %p96
      $region14: #{image_frequency_selection.1} parent=11 // pred_check_branch
        %190 = sbr.rel (%p188) target = $region16
      $region15: #{image_frequency_selection.1} parent=11 // pred_region
        _
      $region16: #{image_frequency_selection.1} parent=11 // pred_fallthru
        _
      // Predicated region
      $region17: #{image_frequency_selection.1} parent=11 // pred_check
        %p191 = pneg %p117
      $region18: #{image_frequency_selection.1} parent=11 // pred_check_branch
        %193 = sbr.rel (%p191) target = $region20
      $region19: #{image_frequency_selection.1} parent=11 // pred_region
        _
      $region20: #{image_frequency_selection.1} parent=11 // pred_fallthru
        _
    $region12: #{image_frequency_selection.1} parent=5 // pred_fallthru
      _
    %p194 = scmp.lt.s32.totalorder %s11, 2
    // Predicated region
    $region21: #{image_frequency_selection.1} parent=5 // pred_check
      %p195 = pneg %p194
    $region22: #{image_frequency_selection.1} parent=5 // pred_check_branch
      %197 = sbr.rel (%p195) target = $region24
    $region23: #{image_frequency_selection.1} parent=5 // pred_region
      // Predicated region
      $region25: #{image_frequency_selection.1} parent=23 // pred_check
        %p198 = pneg %p43
      $region26: #{image_frequency_selection.1} parent=23 // pred_check_branch
        %200 = sbr.rel (%p198) target = $region28
      $region27: #{image_frequency_selection.1} parent=23 // pred_region
        %p201 = scmp.lt.s32.totalorder %s18, 1
        %s202 = scalar_select %p201, %s18, 1
        %s203 = smul.addr %s202, 8
        %s204 = scalar_lea.vmem %s0, %s203
      $region28: #{image_frequency_selection.1} parent=23 // pred_fallthru
        _
      // Predicated region
      $region29: #{image_frequency_selection.1} parent=23 // pred_check
        %p205 = pneg %p69
      $region30: #{image_frequency_selection.1} parent=23 // pred_check_branch
        %207 = sbr.rel (%p205) target = $region32
      $region31: #{image_frequency_selection.1} parent=23 // pred_region
        %p208 = scmp.lt.s32.totalorder %s18, 1
        %s209 = scalar_select %p208, %s18, 1
        %s210 = smul.addr %s209, 8
        %s211 = scalar_lea.vmem %s1, %s210
      $region32: #{image_frequency_selection.1} parent=23 // pred_fallthru
        _
      // Predicated region
      $region33: #{image_frequency_selection.1} parent=23 // pred_check
        %p212 = pneg %p139
      $region34: #{image_frequency_selection.1} parent=23 // pred_check_branch
        %214 = sbr.rel (%p212) target = $region36
      $region35: #{image_frequency_selection.1} parent=23 // pred_region
        %s215 = smul.u32 2, %s19
        %p216 = scmp.lt.s32.totalorder %s18, 1
        %s217 = scalar_select %p216, %s18, 1
        %p218 = scmp.lt.s32.totalorder %s215, 1
        %s219 = scalar_select %p218, %s215, 1
        %s220 = smul.addr %s217, 4
        %s221 = sadd.s32 %s219, %s220
        %s222 = smul.addr %s221, 8
        %s223 = scalar_lea.vmem %s4, %s222
        %s224 = smul.u32 2, %s19
      $region36: #{image_frequency_selection.1} parent=23 // pred_fallthru
        _
    $region24: #{image_frequency_selection.1} parent=5 // pred_fallthru
      _
    %p225 = scmp.le.s32.totalorder 1, %s11
    %p226 = scmp.lt.s32.totalorder %s11, 3
    %p227 = pnand %p225, %p226
    %p228 = pneg %p227
    // Predicated region
    $region37: #{image_frequency_selection.1} parent=5 // pred_check
      _
    $region38: #{image_frequency_selection.1} parent=5 // pred_check_branch
      %230 = sbr.rel (%p227) target = $region40
    $region39: #{image_frequency_selection.1} parent=5 // pred_region
      %s231 = ssub.s32 %s11, 1
      %p232 = scmp.lt.s32.totalorder %s20, 1
      %s233 = scalar_select %p232, %s20, 1
      %s234 = smul.addr %s233, 8
      %s235 = scalar_lea.vmem %s0, %s234
      %p236 = pneg %p49
      %p237 = pneg %p46
      %p238 = scmp.lt.s32.totalorder %s20, 1
      %s239 = scalar_select %p238, %s20, 1
      %s240 = smul.addr %s239, 8
      %s241 = scalar_lea.vmem %s1, %s240
      %p242 = pneg %p75
      %p243 = pneg %p72
      %p244 = pneg %p96
      %p245 = pneg %p93
      %p246 = pneg %p117
      %p247 = pneg %p114
      %s248 = smul.u32 2, %s21
      %p249 = scmp.lt.s32.totalorder %s20, 1
      %s250 = scalar_select %p249, %s20, 1
      %p251 = scmp.lt.s32.totalorder %s248, 1
      %s252 = scalar_select %p251, %s248, 1
      %s253 = smul.addr %s250, 4
      %s254 = sadd.s32 %s252, %s253
      %s255 = smul.addr %s254, 8
      %s256 = scalar_lea.vmem %s4, %s255
      %p257 = pneg %p145
      %p258 = pneg %p142
      %p259 = pneg %p173
      %p260 = pneg %p170
      %s261 = smul.u32 2, %s21
      %p262 = scmp.lt.s32.totalorder %s20, 1
      %s263 = scalar_select %p262, %s20, 1
      %p264 = scmp.lt.s32.totalorder %s261, 1
      %s265 = scalar_select %p264, %s261, 1
      %s266 = smul.addr %s263, 4
      %s267 = sadd.s32 %s265, %s266
      %s268 = smul.addr %s267, 8
      %s269 = scalar_lea.vmem %s5, %s268
      %p270 = scmp.lt.s32.totalorder %s20, 1
      %s271 = scalar_select %p270, %s20, 1
      %s272 = smul.addr %s271, 8
      %s273 = scalar_lea.vmem %s0, %s272
      %p274 = scmp.lt.s32.totalorder %s20, 1
      %s275 = scalar_select %p274, %s20, 1
      %s276 = smul.addr %s275, 8
      %s277 = scalar_lea.vmem %s1, %s276
      %s278 = smul.u32 2, %s21
      %p279 = scmp.lt.s32.totalorder %s20, 1
      %s280 = scalar_select %p279, %s20, 1
      %p281 = scmp.lt.s32.totalorder %s278, 1
      %s282 = scalar_select %p281, %s278, 1
      %s283 = smul.addr %s280, 4
      %s284 = sadd.s32 %s282, %s283
      %s285 = smul.addr %s284, 8
      %s286 = scalar_lea.vmem %s4, %s285
      %s287 = smul.u32 2, %s21
      %s288 = smul.u32 2, %s21
      %p289 = scmp.lt.s32.totalorder %s20, 1
      %s290 = scalar_select %p289, %s20, 1
      %p291 = scmp.lt.s32.totalorder %s288, 1
      %s292 = scalar_select %p291, %s288, 1
      %s293 = smul.addr %s290, 4
      %s294 = sadd.s32 %s292, %s293
      %s295 = smul.addr %s294, 8
      %s296 = scalar_lea.vmem %s5, %s295
      %s297 = smul.u32 2, %s21
      %v298 = vld [vmem:[%s273] sm:$0xff]
      %v299 = vld [vmem:[%s277] sm:$0xff]
      %v300 = vld [vmem:[%s2] sm:$0xff]
      %v301 = vmul.f32 %v298, %v300
      %v302 = vld [vmem:[%s3] sm:$0xff]
      %v303 = vmul.f32 %v299, %v302
      %v304 = vsub.f32 %v301, %v303
      %v305 = vrot.slane %v304, 4
      %v306 = vadd.f32 %v304, %v305
      %v307 = vrot.slane %v306, 2
      %v308 = vadd.f32 %v306, %v307
      %v309 = vrot.slane %v308, 1
      %v310 = vadd.f32 %v308, %v309
      %v311 = vmul.f32 %v310, 0.125
      %v312 = vld [vmem:[%s286] sm:$0xff]
      %v313 = vld [vmem:[%s286 + $0x8] sm:$0xff]
      %v314 = vmul.f32 %v312, %v311
      %v315 = vmul.f32 %v313, %v311
      %316 = vst [vmem:[%s296] sm:$0xff] %v314
      %317 = vst [vmem:[%s296 + $0x8] sm:$0xff] %v315
      %s318 = scalar_lea.vmem %s286, 16
      %v319 = vld [vmem:[%s318] sm:$0xff]
      %v320 = vld [vmem:[%s318 + $0x8] sm:$0xff]
      %v321 = vmul.f32 %v319, %v311
      %v322 = vmul.f32 %v320, %v311
      %s323 = scalar_lea.vmem %s296, 16
      %324 = vst [vmem:[%s323] sm:$0xff] %v321
      %325 = vst [vmem:[%s323 + $0x8] sm:$0xff] %v322
      %s326 = smul.u32 2, %s21
      %p327 = scmp.lt.s32.totalorder %s20, 1
      %s328 = scalar_select %p327, %s20, 1
      %p329 = scmp.lt.s32.totalorder %s326, 1
      %s330 = scalar_select %p329, %s326, 1
      %s331 = smul.addr %s328, 4
      %s332 = sadd.s32 %s330, %s331
      %s333 = smul.addr %s332, 8
      %s334 = scalar_lea.vmem %s5, %s333
      // Predicated region
      $region41: #{image_frequency_selection.1} parent=39 // pred_check
        %p335 = pneg %p170
      $region42: #{image_frequency_selection.1} parent=39 // pred_check_branch
        %337 = sbr.rel (%p335) target = $region44
      $region43: #{image_frequency_selection.1} parent=39 // pred_region
        %s338 = smul.u32 2, %s21
      $region44: #{image_frequency_selection.1} parent=39 // pred_fallthru
        _
    $region40: #{image_frequency_selection.1} parent=5 // pred_fallthru
      _
    %p339 = scmp.le.s32.totalorder 2, %s11
    // Predicated region
    $region45: #{image_frequency_selection.1} parent=5 // pred_check
      %p340 = pneg %p339
    $region46: #{image_frequency_selection.1} parent=5 // pred_check_branch
      %342 = sbr.rel (%p340) target = $region48
    $region47: #{image_frequency_selection.1} parent=5 // pred_region
      %s343 = ssub.s32 %s11, 2
      // Predicated region
      $region49: #{image_frequency_selection.1} parent=47 // pred_check
        %p344 = pneg %p176
      $region50: #{image_frequency_selection.1} parent=47 // pred_check_branch
        %346 = sbr.rel (%p344) target = $region52
      $region51: #{image_frequency_selection.1} parent=47 // pred_region
        %s347 = smul.u32 2, %s23
        %p348 = scmp.lt.s32.totalorder %s22, 1
        %s349 = scalar_select %p348, %s22, 1
        %p350 = scmp.lt.s32.totalorder %s347, 1
        %s351 = scalar_select %p350, %s347, 1
        %s352 = smul.addr %s349, 4
        %s353 = sadd.s32 %s351, %s352
        %s354 = smul.addr %s353, 8
        %s355 = scalar_lea.vmem %s5, %s354
      $region52: #{image_frequency_selection.1} parent=47 // pred_fallthru
        _
    $region48: #{image_frequency_selection.1} parent=5 // pred_fallthru
      _
  $region6: #{image_frequency_selection.1} parent=0 // loop_footer
    %s15 = sadd.s32 1, %s11
  $region7: #{image_frequency_selection.1} parent=0 // loop_footer_branch
    %10 = sbr.rel target = $region3
  $region8: #{image_frequency_selection.1} parent=0 // loop_exit
    _

</llo_original>
